<compile_context>
chip_gen: v6e
topology: v6e:2x2x1
jax: 0.10.0
libtpu: 0.0.40
codegen_flags: <defaults>
</compile_context>

<pallas_src>
import jax
import jax.numpy as jnp
from jax.experimental import pallas as pl
from jax.experimental.pallas import tpu as pltpu


# --------------------------------- kernel ----------------------------------
def _hard_swish_kernel(x_ref, o_ref):
    x = x_ref[...]
    # y = x * relu6(x + 3) / 6  ==  x * clip(x + 3, 0, 6) * (1/6)   (pure VPU work,
    # computed in the input dtype; constants are weakly typed so no upcast happens)
    o_ref[...] = (x * jnp.clip(x + 3.0, 0.0, 6.0) * (1.0 / 6.0)).astype(o_ref.dtype)


def _hard_swish_expr(x):
    return x * jnp.clip(x + 3.0, 0.0, 6.0) * (1.0 / 6.0)


# --------------------------------- wrapper ---------------------------------
_FAST_PATH_ELEMS = 32 * 1024  # below this, fused XLA elementwise beats a pallas_call


def hard_swish(x, *, target_block_bytes=2 * 1024 * 1024):
    """Elementwise Hard-Swish for arbitrary shape via a tiled Pallas TPU kernel."""
    orig_shape = x.shape
    dtype = x.dtype
    total = int(x.size)
    if total == 0:
        return x
    if total < _FAST_PATH_ELEMS:
        # Tiny activations: launch overhead would dominate; let XLA fuse it.
        return _hard_swish_expr(x).astype(dtype)

    itemsize = jnp.dtype(dtype).itemsize
    flat = x.reshape(-1)

    # Pad only when the total is not a multiple of 128 (rare; < 128 elements of pad).
    pad = (-total) % 128
    if pad:
        flat = jnp.pad(flat, (0, pad))  # hard_swish(0) == 0, safe
    padded_total = total + pad

    # Lane-dense 2-D view: widest column count (multiple of 128) dividing the
    # padded length, so the reshape is free and every block is a contiguous span.
    cols = 128
    for c in (2048, 1024, 512, 256):
        if padded_total % c == 0:
            cols = c
            break
    rows = padded_total // cols

    # ~target_block_bytes per block (multiple of 8 rows). Partial final block along
    # the row axis is handled by Pallas (OOB reads padded, OOB writes dropped).
    block_rows = max(8, (target_block_bytes // (cols * itemsize)) // 8 * 8)
    if block_rows >= rows:
        block_rows = rows
    # Keep at least 2 grid steps so the "parallel" axis feeds both v7x TensorCores.
    if rows > 8 and pl.cdiv(rows, block_rows) < 2:
        block_rows = max(8, pl.cdiv(rows, 2) // 8 * 8)
    n_blocks = pl.cdiv(rows, block_rows)

    x2d = flat.reshape(rows, cols)

    cost = pl.CostEstimate(
        flops=5 * padded_total,               # add + 2x clamp + 2x mul per element
        transcendentals=0,
        bytes_accessed=2 * padded_total * itemsize,
    )

    out2d = pl.pallas_call(
        _hard_swish_kernel,
        out_shape=jax.ShapeDtypeStruct((rows, cols), dtype),
        grid=(n_blocks,),
        in_specs=[pl.BlockSpec((block_rows, cols), lambda i: (i, 0))],
        out_specs=pl.BlockSpec((block_rows, cols), lambda i: (i, 0)),
        compiler_params=pltpu.CompilerParams(
            dimension_semantics=("parallel",),   # shard tiles across TCs
        ),
        cost_estimate=cost,
    )(x2d)

    out = out2d.reshape(-1)
    if pad:
        out = out[:total]
    return out.reshape(orig_shape)


# ------------------------- pure-JAX reference -------------------------
def reference_hard_swish(x):
    return x * jnp.clip(x + 3.0, 0.0, 6.0) / 6.0


if __name__ == "__main__":
    keys = jax.random.split(jax.random.PRNGKey(0), 4)

    # 1) Small NCHW activation implied by the module's typical use: fused fast path.
    x_small = 4.0 * jax.random.normal(keys[0], (2, 4, 16, 16), jnp.float32)
    y_small = jax.block_until_ready(hard_swish(x_small))
    assert y_small.shape == x_small.shape
    assert jnp.allclose(y_small, reference_hard_swish(x_small), rtol=1e-5, atol=1e-5)

    # 2) Larger activation: exercises the Pallas kernel path (2 parallel blocks).
    x_big = 4.0 * jax.random.normal(keys[1], (2, 32, 64, 64), jnp.float32)
    y_big = jax.block_until_ready(hard_swish(x_big))
    assert y_big.shape == x_big.shape
    assert jnp.allclose(y_big, reference_hard_swish(x_big), rtol=1e-5, atol=1e-5)

    # 3) Ragged element count (not a multiple of 128): tiny pad + partial row block.
    x_rag = 4.0 * jax.random.normal(keys[2], (5, 7, 1001), jnp.float32)
    y_rag = jax.block_until_ready(hard_swish(x_rag))
    assert y_rag.shape == x_rag.shape
    assert jnp.allclose(y_rag, reference_hard_swish(x_rag), rtol=1e-5, atol=1e-5)

    # 4) bf16 input: computed natively in bf16 inside the kernel.
    x_bf = (4.0 * jax.random.normal(keys[3], (4, 32, 32, 32), jnp.float32)).astype(jnp.bfloat16)
    y_bf = jax.block_until_ready(hard_swish(x_bf))
    assert y_bf.dtype == jnp.bfloat16 and y_bf.shape == x_bf.shape
    ref_bf = reference_hard_swish(x_bf.astype(jnp.float32))
    assert jnp.allclose(y_bf.astype(jnp.float32), ref_bf, rtol=5e-2, atol=5e-2)

    print("KERNEL_OK")
</pallas_src>

<mosaic_0001>
module attributes {stable_mosaic.version = 11 : i64} {
  func.func @_hard_swish_kernel(%arg0: i32, %arg1: memref<64x2048xf32, #tpu.memory_space<vmem>>, %arg2: memref<64x2048xf32, #tpu.memory_space<vmem>>) attributes {dimension_semantics = [#tpu.dimension_semantics<parallel>], iteration_bounds = array<i64: 2>, scalar_prefetch = 0 : i64, scratch_operands = 0 : i64, tpu.core_type = #tpu.core_type<tc>, window_params = [{transform_indices = @transform_0, window_bounds = array<i64: 64, 2048>}, {transform_indices = @transform_1, window_bounds = array<i64: 64, 2048>}]} {
    %c0 = arith.constant 0 : index
    %c0_0 = arith.constant 0 : index
    %0 = vector.load %arg1[%c0, %c0_0] : memref<64x2048xf32, #tpu.memory_space<vmem>>, vector<64x2048xf32>
    %cst = arith.constant 3.000000e+00 : f32
    %1 = vector.broadcast %cst : f32 to vector<64x2048xf32>
    %2 = arith.addf %0, %1 : vector<64x2048xf32>
    %cst_1 = arith.constant 0.000000e+00 : f32
    %cst_2 = arith.constant 6.000000e+00 : f32
    %3 = vector.broadcast %cst_1 : f32 to vector<64x2048xf32>
    %4 = arith.maximumf %3, %2 : vector<64x2048xf32>
    %5 = vector.broadcast %cst_2 : f32 to vector<64x2048xf32>
    %6 = arith.minimumf %5, %4 : vector<64x2048xf32>
    %7 = arith.mulf %0, %6 : vector<64x2048xf32>
    %cst_3 = arith.constant 0.166666672 : f32
    %8 = vector.broadcast %cst_3 : f32 to vector<64x2048xf32>
    %9 = arith.mulf %7, %8 : vector<64x2048xf32>
    %c0_4 = arith.constant 0 : index
    %c0_5 = arith.constant 0 : index
    %10 = vector.load %arg2[%c0_4, %c0_5] : memref<64x2048xf32, #tpu.memory_space<vmem>>, vector<64x2048xf32>
    tpu.vector_store %arg2[%c0_4, %c0_5], %9 {strides = array<i32>} : memref<64x2048xf32, #tpu.memory_space<vmem>>, vector<64x2048xf32>,
    return
  }
  func.func @transform_0(%arg0: i32) -> (i32, i32) {
    %c0_i32 = arith.constant 0 : i32
    %c0_i32_0 = arith.constant 0 : i32
    return %arg0, %c0_i32 : i32, i32
  }
  func.func @transform_1(%arg0: i32) -> (i32, i32) {
    %c0_i32 = arith.constant 0 : i32
    %c0_i32_0 = arith.constant 0 : i32
    return %arg0, %c0_i32 : i32, i32
  }
}

</mosaic_0001>

<llo_original>
// kernel: tpu_custom_call.1
$region0: #{tpu_custom_call.1}
  #allocation0 [shape = 'u32[]', space=smem, size = 0x4, offset = 0x4, fixed_abs, tag = 'smem constant byte address 0x4 - core index']
  #allocation1 [shape = 'u32[144,128]{1,0:T(1,128)}', space=vmem, size = 0x12000, scoped, tag = 'internal scratch']
  %s0 = inlined_call_operand.hbm [shape: f32[128,2048], index: 0, kind: input, shape index: {}]
  %s1 = inlined_call_operand.hbm [shape: f32[128,2048], index: 1, kind: output, shape index: {}]
  %s2 = sld [smem:[#allocation0]]
  $region41: #{tpu_custom_call.1} parent=0
    _
  %s4 = ssub.s32 1, %s2
  %s5 = scalar_select 0, %s4, %s2
  $region1: #{tpu_custom_call.1} parent=0
    #allocation2 [shape = 'u8[1048576]{0}', space=vmem, size = 0x100000, scoped, tag = 'input window, operand 0']
    #allocation3 [shape = 's32[2]{0}', space=sflag, size = 0x8, scoped, tag = 'scoped memory for tpu_custom_call.1']
    #allocation4 [shape = 's32[2]{0}', space=sflag, size = 0x8, scoped, tag = 'scoped memory for tpu_custom_call.1']
    #allocation5 [shape = 'u8[1048576]{0}', space=vmem, size = 0x100000, scoped, tag = 'output window, operand 0']
    %6 = vsyncpa [#allocation3], 0
    %s7 = scalar_lea.sflag [#allocation3], 1
    %8 = vsyncpa %s7, 0
    %9 = vsyncpa [#allocation4], 0
    %s10 = scalar_lea.sflag [#allocation4], 1
    %11 = vsyncpa %s10, 0
    loop: start=0, step=1, limit=4
    $region2: #{tpu_custom_call.1} parent=1 // loop_pre_header
      _
    $region3: #{tpu_custom_call.1} parent=1 // loop_header
      %s13 = sphi 0, %s17
      %p14 = scmp.ge.s32.totalorder %s13, 4
      %s23 = sphi 0, %s25
      %s26 = sphi 0, %s23
      %s27 = sphi 0, %s26
      %s43 = sphi 0, %s27
      %s49 = sphi 0, %s51
      %s52 = sphi 0, %s49
      %s53 = sphi 0, %s52
      %s69 = sphi 0, %s53
    $region4: #{tpu_custom_call.1} parent=1 // loop_header_branch
      %16 = sbr.rel (%p14) target = $region8
    $region5: #{tpu_custom_call.1} parent=1 // loop_body
      %s18 = ssub.s32 %s13, 1
      %s19 = ssub.s32 %s13, 2
      %s20 = sadd.s32 %s13, 1
      %s21 = ssub.s32 %s13, %s20
      %p22 = scmp.eq.s32.totalorder %s21, 0
      %s24 = sadd.s32 %s23, 1
      %s25 = scalar_select %p22, %s23, %s24
      %p28 = pneg %p22
      %p29 = scmp.eq.s32.totalorder %s13, 1
      %p30 = por %p28, %p29
      %p31 = scmp.ne.s32.totalorder %s23, %s26
      %p32 = scmp.eq.s32.totalorder %s13, 0
      %p33 = por %p31, %p32
      %p34 = scmp.ne.s32.totalorder %s23, %s26
      %p35 = scmp.eq.s32.totalorder %s18, 1
      %p36 = por %p34, %p35
      %p37 = scmp.ne.s32.totalorder %s26, %s27
      %p38 = scmp.eq.s32.totalorder %s18, 0
      %p39 = por %p37, %p38
      %p40 = scmp.ne.s32.totalorder %s26, %s27
      %p41 = scmp.eq.s32.totalorder %s19, 1
      %p42 = por %p40, %p41
      %p44 = scmp.ne.s32.totalorder %s27, %s43
      %p45 = scmp.eq.s32.totalorder %s19, 0
      %p46 = por %p44, %p45
      %s47 = ssub.s32 %s13, %s20
      %p48 = scmp.eq.s32.totalorder %s47, 0
      %s50 = sadd.s32 %s49, 1
      %s51 = scalar_select %p48, %s49, %s50
      %p54 = pneg %p48
      %p55 = scmp.eq.s32.totalorder %s13, 1
      %p56 = por %p54, %p55
      %p57 = scmp.ne.s32.totalorder %s49, %s52
      %p58 = scmp.eq.s32.totalorder %s13, 0
      %p59 = por %p57, %p58
      %p60 = scmp.ne.s32.totalorder %s49, %s52
      %p61 = scmp.eq.s32.totalorder %s18, 1
      %p62 = por %p60, %p61
      %p63 = scmp.ne.s32.totalorder %s52, %s53
      %p64 = scmp.eq.s32.totalorder %s18, 0
      %p65 = por %p63, %p64
      %p66 = scmp.ne.s32.totalorder %s52, %s53
      %p67 = scmp.eq.s32.totalorder %s19, 1
      %p68 = por %p66, %p67
      %p70 = scmp.ne.s32.totalorder %s53, %s69
      %p71 = scmp.eq.s32.totalorder %s19, 0
      %p72 = por %p70, %p71
      %p73 = scmp.le.s32.totalorder 1, %s13
      %p74 = scmp.lt.s32.totalorder %s13, 3
      %p75 = pnand %p73, %p74
      %p76 = pneg %p75
      // Predicated region
      $region9: #{tpu_custom_call.1} parent=5 // pred_check
        _
      $region10: #{tpu_custom_call.1} parent=5 // pred_check_branch
        %78 = sbr.rel (%p75) target = $region12
      $region11: #{tpu_custom_call.1} parent=5 // pred_region
        %s79 = ssub.s32 %s13, 1
      $region12: #{tpu_custom_call.1} parent=5 // pred_fallthru
        _
      %p80 = scmp.lt.s32.totalorder %s13, 2
      // Predicated region
      $region13: #{tpu_custom_call.1} parent=5 // pred_check
        %p81 = pneg %p80
      $region14: #{tpu_custom_call.1} parent=5 // pred_check_branch
        %83 = sbr.rel (%p81) target = $region16
      $region15: #{tpu_custom_call.1} parent=5 // pred_region
        // Predicated region
        $region17: #{tpu_custom_call.1} parent=15 // pred_check
          %p84 = pneg %p33
        $region18: #{tpu_custom_call.1} parent=15 // pred_check_branch
          %86 = sbr.rel (%p84) target = $region20
        $region19: #{tpu_custom_call.1} parent=15 // pred_region
          %s87 = sand.u32 %s23, 1
          %s88 = scalar_lea.sflag [#allocation3], %s87
          %s89 = sand.u32 %s23, 1
          %s90 = smul.addr %s89, 1024
          %s91 = scalar_lea.vmem [#allocation2], %s90
          %s92 = smul.u32 8, %s13
          %s94 = ssub.s32 16384, 16384
          %95 = vsyncadd %s88, %s94
          %s96 = smul.addr %s92, 16
          %s97 = smul.addr %s96, 128
          %s98 = scalar_lea.hbm %s0, %s97
          %s99 = sshll.u32 %s91, 4
          %s100 = int_to_ptr.vmem [resolvable:$true] %s99
          %105 = dma.hbm_to_vmem [thread:$0]  %s98, 16384, %s100, %s88, 2048, 2048, 128
        $region20: #{tpu_custom_call.1} parent=15 // pred_fallthru
          _
      $region16: #{tpu_custom_call.1} parent=5 // pred_fallthru
        _
      %p106 = scmp.le.s32.totalorder 1, %s13
      %p107 = scmp.lt.s32.totalorder %s13, 3
      %p108 = pnand %p106, %p107
      %p109 = pneg %p108
      // Predicated region
      $region21: #{tpu_custom_call.1} parent=5 // pred_check
        _
      $region22: #{tpu_custom_call.1} parent=5 // pred_check_branch
        %111 = sbr.rel (%p108) target = $region24
      $region23: #{tpu_custom_call.1} parent=5 // pred_region
        %s112 = ssub.s32 %s13, 1
        %s113 = sand.u32 %s26, 1
        %s114 = scalar_lea.sflag [#allocation3], %s113
        %s115 = sand.u32 %s26, 1
        %s116 = smul.addr %s115, 1024
        %s117 = scalar_lea.vmem [#allocation2], %s116
        // Predicated region
        $region25: #{tpu_custom_call.1} parent=23 // pred_check
          %p118 = pneg %p39
        $region26: #{tpu_custom_call.1} parent=23 // pred_check_branch
          %120 = sbr.rel (%p118) target = $region28
        $region27: #{tpu_custom_call.1} parent=23 // pred_region
          %121 = dma.done %s114, 16384
        $region28: #{tpu_custom_call.1} parent=23 // pred_fallthru
          _
        %s122 = sand.u32 %s26, 1
        %s123 = scalar_lea.sflag [#allocation3], %s122
        %s124 = sand.u32 %s26, 1
        %s125 = smul.addr %s124, 1024
        %s126 = scalar_lea.vmem [#allocation2], %s125
        %p127 = pneg %p39
        %p128 = pneg %p36
        %p129 = pneg %p65
        %p130 = pneg %p62
        %s131 = sand.u32 %s52, 1
        %s132 = scalar_lea.sflag [#allocation4], %s131
        %s133 = sand.u32 %s52, 1
        %s134 = smul.addr %s133, 1024
        %s135 = scalar_lea.vmem [#allocation5], %s134
        %s136 = smul.u32 8, %s18
        %s137 = smul.u32 8, %s18
        %v138 = vld [vmem:[%s117] sm:$0xff]
        %v139 = vld [vmem:[%s117 + $0x8] sm:$0xff]
        %v140 = vld [vmem:[%s117 + $0x10] sm:$0xff]
        %v141 = vld [vmem:[%s117 + $0x18] sm:$0xff]
        %v142 = vld [vmem:[%s117 + $0x20] sm:$0xff]
        %v143 = vld [vmem:[%s117 + $0x28] sm:$0xff]
        %v144 = vld [vmem:[%s117 + $0x30] sm:$0xff]
        %v145 = vld [vmem:[%s117 + $0x38] sm:$0xff]
        %v146 = vld [vmem:[%s117 + $0x40] sm:$0xff]
        %v147 = vld [vmem:[%s117 + $0x48] sm:$0xff]
        %v148 = vld [vmem:[%s117 + $0x50] sm:$0xff]
        %v149 = vld [vmem:[%s117 + $0x58] sm:$0xff]
        %v150 = vld [vmem:[%s117 + $0x60] sm:$0xff]
        %v151 = vld [vmem:[%s117 + $0x68] sm:$0xff]
        %v152 = vld [vmem:[%s117 + $0x70] sm:$0xff]
        %v153 = vld [vmem:[%s117 + $0x78] sm:$0xff]
        %v154 = vld [vmem:[%s117 + $0x80] sm:$0xff]
        %v155 = vld [vmem:[%s117 + $0x88] sm:$0xff]
        %v156 = vld [vmem:[%s117 + $0x90] sm:$0xff]
        %v157 = vld [vmem:[%s117 + $0x98] sm:$0xff]
        %v158 = vld [vmem:[%s117 + $0xa0] sm:$0xff]
        %v159 = vld [vmem:[%s117 + $0xa8] sm:$0xff]
        %v160 = vld [vmem:[%s117 + $0xb0] sm:$0xff]
        %v161 = vld [vmem:[%s117 + $0xb8] sm:$0xff]
        %v162 = vld [vmem:[%s117 + $0xc0] sm:$0xff]
        %v163 = vld [vmem:[%s117 + $0xc8] sm:$0xff]
        %v164 = vld [vmem:[%s117 + $0xd0] sm:$0xff]
        %v165 = vld [vmem:[%s117 + $0xd8] sm:$0xff]
        %v166 = vld [vmem:[%s117 + $0xe0] sm:$0xff]
        %v167 = vld [vmem:[%s117 + $0xe8] sm:$0xff]
        %v168 = vld [vmem:[%s117 + $0xf0] sm:$0xff]
        %v169 = vld [vmem:[%s117 + $0xf8] sm:$0xff]
        %v170 = vld [vmem:[%s117 + $0x100] sm:$0xff]
        %v171 = vld [vmem:[%s117 + $0x108] sm:$0xff]
        %v172 = vld [vmem:[%s117 + $0x110] sm:$0xff]
        %v173 = vld [vmem:[%s117 + $0x118] sm:$0xff]
        %v174 = vld [vmem:[%s117 + $0x120] sm:$0xff]
        %v175 = vld [vmem:[%s117 + $0x128] sm:$0xff]
        %v176 = vld [vmem:[%s117 + $0x130] sm:$0xff]
        %v177 = vld [vmem:[%s117 + $0x138] sm:$0xff]
        %v178 = vld [vmem:[%s117 + $0x140] sm:$0xff]
        %v179 = vld [vmem:[%s117 + $0x148] sm:$0xff]
        %v180 = vld [vmem:[%s117 + $0x150] sm:$0xff]
        %v181 = vld [vmem:[%s117 + $0x158] sm:$0xff]
        %v182 = vld [vmem:[%s117 + $0x160] sm:$0xff]
        %v183 = vld [vmem:[%s117 + $0x168] sm:$0xff]
        %v184 = vld [vmem:[%s117 + $0x170] sm:$0xff]
        %v185 = vld [vmem:[%s117 + $0x178] sm:$0xff]
        %v186 = vld [vmem:[%s117 + $0x180] sm:$0xff]
        %v187 = vld [vmem:[%s117 + $0x188] sm:$0xff]
        %v188 = vld [vmem:[%s117 + $0x190] sm:$0xff]
        %v189 = vld [vmem:[%s117 + $0x198] sm:$0xff]
        %v190 = vld [vmem:[%s117 + $0x1a0] sm:$0xff]
        %v191 = vld [vmem:[%s117 + $0x1a8] sm:$0xff]
        %v192 = vld [vmem:[%s117 + $0x1b0] sm:$0xff]
        %v193 = vld [vmem:[%s117 + $0x1b8] sm:$0xff]
        %v194 = vld [vmem:[%s117 + $0x1c0] sm:$0xff]
        %v195 = vld [vmem:[%s117 + $0x1c8] sm:$0xff]
        %v196 = vld [vmem:[%s117 + $0x1d0] sm:$0xff]
        %v197 = vld [vmem:[%s117 + $0x1d8] sm:$0xff]
        %v198 = vld [vmem:[%s117 + $0x1e0] sm:$0xff]
        %v199 = vld [vmem:[%s117 + $0x1e8] sm:$0xff]
        %v200 = vld [vmem:[%s117 + $0x1f0] sm:$0xff]
        %v201 = vld [vmem:[%s117 + $0x1f8] sm:$0xff]
        %v202 = vld [vmem:[%s117 + $0x200] sm:$0xff]
        %v203 = vld [vmem:[%s117 + $0x208] sm:$0xff]
        %v204 = vld [vmem:[%s117 + $0x210] sm:$0xff]
        %v205 = vld [vmem:[%s117 + $0x218] sm:$0xff]
        %v206 = vld [vmem:[%s117 + $0x220] sm:$0xff]
        %v207 = vld [vmem:[%s117 + $0x228] sm:$0xff]
        %v208 = vld [vmem:[%s117 + $0x230] sm:$0xff]
        %v209 = vld [vmem:[%s117 + $0x238] sm:$0xff]
        %v210 = vld [vmem:[%s117 + $0x240] sm:$0xff]
        %v211 = vld [vmem:[%s117 + $0x248] sm:$0xff]
        %v212 = vld [vmem:[%s117 + $0x250] sm:$0xff]
        %v213 = vld [vmem:[%s117 + $0x258] sm:$0xff]
        %v214 = vld [vmem:[%s117 + $0x260] sm:$0xff]
        %v215 = vld [vmem:[%s117 + $0x268] sm:$0xff]
        %v216 = vld [vmem:[%s117 + $0x270] sm:$0xff]
        %v217 = vld [vmem:[%s117 + $0x278] sm:$0xff]
        %v218 = vld [vmem:[%s117 + $0x280] sm:$0xff]
        %v219 = vld [vmem:[%s117 + $0x288] sm:$0xff]
        %v220 = vld [vmem:[%s117 + $0x290] sm:$0xff]
        %v221 = vld [vmem:[%s117 + $0x298] sm:$0xff]
        %v222 = vld [vmem:[%s117 + $0x2a0] sm:$0xff]
        %v223 = vld [vmem:[%s117 + $0x2a8] sm:$0xff]
        %v224 = vld [vmem:[%s117 + $0x2b0] sm:$0xff]
        %v225 = vld [vmem:[%s117 + $0x2b8] sm:$0xff]
        %v226 = vld [vmem:[%s117 + $0x2c0] sm:$0xff]
        %v227 = vld [vmem:[%s117 + $0x2c8] sm:$0xff]
        %v228 = vld [vmem:[%s117 + $0x2d0] sm:$0xff]
        %v229 = vld [vmem:[%s117 + $0x2d8] sm:$0xff]
        %v230 = vld [vmem:[%s117 + $0x2e0] sm:$0xff]
        %v231 = vld [vmem:[%s117 + $0x2e8] sm:$0xff]
        %v232 = vld [vmem:[%s117 + $0x2f0] sm:$0xff]
        %v233 = vld [vmem:[%s117 + $0x2f8] sm:$0xff]
        %v234 = vld [vmem:[%s117 + $0x300] sm:$0xff]
        %v235 = vld [vmem:[%s117 + $0x308] sm:$0xff]
        %v236 = vld [vmem:[%s117 + $0x310] sm:$0xff]
        %v237 = vld [vmem:[%s117 + $0x318] sm:$0xff]
        %v238 = vld [vmem:[%s117 + $0x320] sm:$0xff]
        %v239 = vld [vmem:[%s117 + $0x328] sm:$0xff]
        %v240 = vld [vmem:[%s117 + $0x330] sm:$0xff]
        %v241 = vld [vmem:[%s117 + $0x338] sm:$0xff]
        %v242 = vld [vmem:[%s117 + $0x340] sm:$0xff]
        %v243 = vld [vmem:[%s117 + $0x348] sm:$0xff]
        %v244 = vld [vmem:[%s117 + $0x350] sm:$0xff]
        %v245 = vld [vmem:[%s117 + $0x358] sm:$0xff]
        %v246 = vld [vmem:[%s117 + $0x360] sm:$0xff]
        %v247 = vld [vmem:[%s117 + $0x368] sm:$0xff]
        %v248 = vld [vmem:[%s117 + $0x370] sm:$0xff]
        %v249 = vld [vmem:[%s117 + $0x378] sm:$0xff]
        %v250 = vld [vmem:[%s117 + $0x380] sm:$0xff]
        %v251 = vld [vmem:[%s117 + $0x388] sm:$0xff]
        %v252 = vld [vmem:[%s117 + $0x390] sm:$0xff]
        %v253 = vld [vmem:[%s117 + $0x398] sm:$0xff]
        %v254 = vld [vmem:[%s117 + $0x3a0] sm:$0xff]
        %v255 = vld [vmem:[%s117 + $0x3a8] sm:$0xff]
        %v256 = vld [vmem:[%s117 + $0x3b0] sm:$0xff]
        %v257 = vld [vmem:[%s117 + $0x3b8] sm:$0xff]
        %v258 = vld [vmem:[%s117 + $0x3c0] sm:$0xff]
        %v259 = vld [vmem:[%s117 + $0x3c8] sm:$0xff]
        %v260 = vld [vmem:[%s117 + $0x3d0] sm:$0xff]
        %v261 = vld [vmem:[%s117 + $0x3d8] sm:$0xff]
        %v262 = vld [vmem:[%s117 + $0x3e0] sm:$0xff]
        %v263 = vld [vmem:[%s117 + $0x3e8] sm:$0xff]
        %v264 = vld [vmem:[%s117 + $0x3f0] sm:$0xff]
        %v265 = vld [vmem:[%s117 + $0x3f8] sm:$0xff]
        %v266 = vadd.f32 %v138, 3.0
        %v267 = vadd.f32 %v139, 3.0
        %v268 = vadd.f32 %v140, 3.0
        %v269 = vadd.f32 %v141, 3.0
        %v270 = vadd.f32 %v142, 3.0
        %v271 = vadd.f32 %v143, 3.0
        %v272 = vadd.f32 %v144, 3.0
        %v273 = vadd.f32 %v145, 3.0
        %v274 = vadd.f32 %v146, 3.0
        %v275 = vadd.f32 %v147, 3.0
        %v276 = vadd.f32 %v148, 3.0
        %v277 = vadd.f32 %v149, 3.0
        %v278 = vadd.f32 %v150, 3.0
        %v279 = vadd.f32 %v151, 3.0
        %v280 = vadd.f32 %v152, 3.0
        %v281 = vadd.f32 %v153, 3.0
        %v282 = vadd.f32 %v154, 3.0
        %v283 = vadd.f32 %v155, 3.0
        %v284 = vadd.f32 %v156, 3.0
        %v285 = vadd.f32 %v157, 3.0
        %v286 = vadd.f32 %v158, 3.0
        %v287 = vadd.f32 %v159, 3.0
        %v288 = vadd.f32 %v160, 3.0
        %v289 = vadd.f32 %v161, 3.0
        %v290 = vadd.f32 %v162, 3.0
        %v291 = vadd.f32 %v163, 3.0
        %v292 = vadd.f32 %v164, 3.0
        %v293 = vadd.f32 %v165, 3.0
        %v294 = vadd.f32 %v166, 3.0
        %v295 = vadd.f32 %v167, 3.0
        %v296 = vadd.f32 %v168, 3.0
        %v297 = vadd.f32 %v169, 3.0
        %v298 = vadd.f32 %v170, 3.0
        %v299 = vadd.f32 %v171, 3.0
        %v300 = vadd.f32 %v172, 3.0
        %v301 = vadd.f32 %v173, 3.0
        %v302 = vadd.f32 %v174, 3.0
        %v303 = vadd.f32 %v175, 3.0
        %v304 = vadd.f32 %v176, 3.0
        %v305 = vadd.f32 %v177, 3.0
        %v306 = vadd.f32 %v178, 3.0
        %v307 = vadd.f32 %v179, 3.0
        %v308 = vadd.f32 %v180, 3.0
        %v309 = vadd.f32 %v181, 3.0
        %v310 = vadd.f32 %v182, 3.0
        %v311 = vadd.f32 %v183, 3.0
        %v312 = vadd.f32 %v184, 3.0
        %v313 = vadd.f32 %v185, 3.0
        %v314 = vadd.f32 %v186, 3.0
        %v315 = vadd.f32 %v187, 3.0
        %v316 = vadd.f32 %v188, 3.0
        %v317 = vadd.f32 %v189, 3.0
        %v318 = vadd.f32 %v190, 3.0
        %v319 = vadd.f32 %v191, 3.0
        %v320 = vadd.f32 %v192, 3.0
        %v321 = vadd.f32 %v193, 3.0
        %v322 = vadd.f32 %v194, 3.0
        %v323 = vadd.f32 %v195, 3.0
        %v324 = vadd.f32 %v196, 3.0
        %v325 = vadd.f32 %v197, 3.0
        %v326 = vadd.f32 %v198, 3.0
        %v327 = vadd.f32 %v199, 3.0
        %v328 = vadd.f32 %v200, 3.0
        %v329 = vadd.f32 %v201, 3.0
        %v330 = vadd.f32 %v202, 3.0
        %v331 = vadd.f32 %v203, 3.0
        %v332 = vadd.f32 %v204, 3.0
        %v333 = vadd.f32 %v205, 3.0
        %v334 = vadd.f32 %v206, 3.0
        %v335 = vadd.f32 %v207, 3.0
        %v336 = vadd.f32 %v208, 3.0
        %v337 = vadd.f32 %v209, 3.0
        %v338 = vadd.f32 %v210, 3.0
        %v339 = vadd.f32 %v211, 3.0
        %v340 = vadd.f32 %v212, 3.0
        %v341 = vadd.f32 %v213, 3.0
        %v342 = vadd.f32 %v214, 3.0
        %v343 = vadd.f32 %v215, 3.0
        %v344 = vadd.f32 %v216, 3.0
        %v345 = vadd.f32 %v217, 3.0
        %v346 = vadd.f32 %v218, 3.0
        %v347 = vadd.f32 %v219, 3.0
        %v348 = vadd.f32 %v220, 3.0
        %v349 = vadd.f32 %v221, 3.0
        %v350 = vadd.f32 %v222, 3.0
        %v351 = vadd.f32 %v223, 3.0
        %v352 = vadd.f32 %v224, 3.0
        %v353 = vadd.f32 %v225, 3.0
        %v354 = vadd.f32 %v226, 3.0
        %v355 = vadd.f32 %v227, 3.0
        %v356 = vadd.f32 %v228, 3.0
        %v357 = vadd.f32 %v229, 3.0
        %v358 = vadd.f32 %v230, 3.0
        %v359 = vadd.f32 %v231, 3.0
        %v360 = vadd.f32 %v232, 3.0
        %v361 = vadd.f32 %v233, 3.0
        %v362 = vadd.f32 %v234, 3.0
        %v363 = vadd.f32 %v235, 3.0
        %v364 = vadd.f32 %v236, 3.0
        %v365 = vadd.f32 %v237, 3.0
        %v366 = vadd.f32 %v238, 3.0
        %v367 = vadd.f32 %v239, 3.0
        %v368 = vadd.f32 %v240, 3.0
        %v369 = vadd.f32 %v241, 3.0
        %v370 = vadd.f32 %v242, 3.0
        %v371 = vadd.f32 %v243, 3.0
        %v372 = vadd.f32 %v244, 3.0
        %v373 = vadd.f32 %v245, 3.0
        %v374 = vadd.f32 %v246, 3.0
        %v375 = vadd.f32 %v247, 3.0
        %v376 = vadd.f32 %v248, 3.0
        %v377 = vadd.f32 %v249, 3.0
        %v378 = vadd.f32 %v250, 3.0
        %v379 = vadd.f32 %v251, 3.0
        %v380 = vadd.f32 %v252, 3.0
        %v381 = vadd.f32 %v253, 3.0
        %v382 = vadd.f32 %v254, 3.0
        %v383 = vadd.f32 %v255, 3.0
        %v384 = vadd.f32 %v256, 3.0
        %v385 = vadd.f32 %v257, 3.0
        %v386 = vadd.f32 %v258, 3.0
        %v387 = vadd.f32 %v259, 3.0
        %v388 = vadd.f32 %v260, 3.0
        %v389 = vadd.f32 %v261, 3.0
        %v390 = vadd.f32 %v262, 3.0
        %v391 = vadd.f32 %v263, 3.0
        %v392 = vadd.f32 %v264, 3.0
        %v393 = vadd.f32 %v265, 3.0
        %v394 = vmax.f32 %v266, 0.0
        %v395 = vmax.f32 %v267, 0.0
        %v396 = vmax.f32 %v268, 0.0
        %v397 = vmax.f32 %v269, 0.0
        %v398 = vmax.f32 %v270, 0.0
        %v399 = vmax.f32 %v271, 0.0
        %v400 = vmax.f32 %v272, 0.0
        %v401 = vmax.f32 %v273, 0.0
        %v402 = vmax.f32 %v274, 0.0
        %v403 = vmax.f32 %v275, 0.0
        %v404 = vmax.f32 %v276, 0.0
        %v405 = vmax.f32 %v277, 0.0
        %v406 = vmax.f32 %v278, 0.0
        %v407 = vmax.f32 %v279, 0.0
        %v408 = vmax.f32 %v280, 0.0
        %v409 = vmax.f32 %v281, 0.0
        %v410 = vmax.f32 %v282, 0.0
        %v411 = vmax.f32 %v283, 0.0
        %v412 = vmax.f32 %v284, 0.0
        %v413 = vmax.f32 %v285, 0.0
        %v414 = vmax.f32 %v286, 0.0
        %v415 = vmax.f32 %v287, 0.0
        %v416 = vmax.f32 %v288, 0.0
        %v417 = vmax.f32 %v289, 0.0
        %v418 = vmax.f32 %v290, 0.0
        %v419 = vmax.f32 %v291, 0.0
        %v420 = vmax.f32 %v292, 0.0
        %v421 = vmax.f32 %v293, 0.0
        %v422 = vmax.f32 %v294, 0.0
        %v423 = vmax.f32 %v295, 0.0
        %v424 = vmax.f32 %v296, 0.0
        %v425 = vmax.f32 %v297, 0.0
        %v426 = vmax.f32 %v298, 0.0
        %v427 = vmax.f32 %v299, 0.0
        %v428 = vmax.f32 %v300, 0.0
        %v429 = vmax.f32 %v301, 0.0
        %v430 = vmax.f32 %v302, 0.0
        %v431 = vmax.f32 %v303, 0.0
        %v432 = vmax.f32 %v304, 0.0
        %v433 = vmax.f32 %v305, 0.0
        %v434 = vmax.f32 %v306, 0.0
        %v435 = vmax.f32 %v307, 0.0
        %v436 = vmax.f32 %v308, 0.0
        %v437 = vmax.f32 %v309, 0.0
        %v438 = vmax.f32 %v310, 0.0
        %v439 = vmax.f32 %v311, 0.0
        %v440 = vmax.f32 %v312, 0.0
        %v441 = vmax.f32 %v313, 0.0
        %v442 = vmax.f32 %v314, 0.0
        %v443 = vmax.f32 %v315, 0.0
        %v444 = vmax.f32 %v316, 0.0
        %v445 = vmax.f32 %v317, 0.0
        %v446 = vmax.f32 %v318, 0.0
        %v447 = vmax.f32 %v319, 0.0
        %v448 = vmax.f32 %v320, 0.0
        %v449 = vmax.f32 %v321, 0.0
        %v450 = vmax.f32 %v322, 0.0
        %v451 = vmax.f32 %v323, 0.0
        %v452 = vmax.f32 %v324, 0.0
        %v453 = vmax.f32 %v325, 0.0
        %v454 = vmax.f32 %v326, 0.0
        %v455 = vmax.f32 %v327, 0.0
        %v456 = vmax.f32 %v328, 0.0
        %v457 = vmax.f32 %v329, 0.0
        %v458 = vmax.f32 %v330, 0.0
        %v459 = vmax.f32 %v331, 0.0
        %v460 = vmax.f32 %v332, 0.0
        %v461 = vmax.f32 %v333, 0.0
        %v462 = vmax.f32 %v334, 0.0
        %v463 = vmax.f32 %v335, 0.0
        %v464 = vmax.f32 %v336, 0.0
        %v465 = vmax.f32 %v337, 0.0
        %v466 = vmax.f32 %v338, 0.0
        %v467 = vmax.f32 %v339, 0.0
        %v468 = vmax.f32 %v340, 0.0
        %v469 = vmax.f32 %v341, 0.0
        %v470 = vmax.f32 %v342, 0.0
        %v471 = vmax.f32 %v343, 0.0
        %v472 = vmax.f32 %v344, 0.0
        %v473 = vmax.f32 %v345, 0.0
        %v474 = vmax.f32 %v346, 0.0
        %v475 = vmax.f32 %v347, 0.0
        %v476 = vmax.f32 %v348, 0.0
        %v477 = vmax.f32 %v349, 0.0
        %v478 = vmax.f32 %v350, 0.0
        %v479 = vmax.f32 %v351, 0.0
        %v480 = vmax.f32 %v352, 0.0
        %v481 = vmax.f32 %v353, 0.0
        %v482 = vmax.f32 %v354, 0.0
        %v483 = vmax.f32 %v355, 0.0
        %v484 = vmax.f32 %v356, 0.0
        %v485 = vmax.f32 %v357, 0.0
        %v486 = vmax.f32 %v358, 0.0
        %v487 = vmax.f32 %v359, 0.0
        %v488 = vmax.f32 %v360, 0.0
        %v489 = vmax.f32 %v361, 0.0
        %v490 = vmax.f32 %v362, 0.0
        %v491 = vmax.f32 %v363, 0.0
        %v492 = vmax.f32 %v364, 0.0
        %v493 = vmax.f32 %v365, 0.0
        %v494 = vmax.f32 %v366, 0.0
        %v495 = vmax.f32 %v367, 0.0
        %v496 = vmax.f32 %v368, 0.0
        %v497 = vmax.f32 %v369, 0.0
        %v498 = vmax.f32 %v370, 0.0
        %v499 = vmax.f32 %v371, 0.0
        %v500 = vmax.f32 %v372, 0.0
        %v501 = vmax.f32 %v373, 0.0
        %v502 = vmax.f32 %v374, 0.0
        %v503 = vmax.f32 %v375, 0.0
        %v504 = vmax.f32 %v376, 0.0
        %v505 = vmax.f32 %v377, 0.0
        %v506 = vmax.f32 %v378, 0.0
        %v507 = vmax.f32 %v379, 0.0
        %v508 = vmax.f32 %v380, 0.0
        %v509 = vmax.f32 %v381, 0.0
        %v510 = vmax.f32 %v382, 0.0
        %v511 = vmax.f32 %v383, 0.0
        %v512 = vmax.f32 %v384, 0.0
        %v513 = vmax.f32 %v385, 0.0
        %v514 = vmax.f32 %v386, 0.0
        %v515 = vmax.f32 %v387, 0.0
        %v516 = vmax.f32 %v388, 0.0
        %v517 = vmax.f32 %v389, 0.0
        %v518 = vmax.f32 %v390, 0.0
        %v519 = vmax.f32 %v391, 0.0
        %v520 = vmax.f32 %v392, 0.0
        %v521 = vmax.f32 %v393, 0.0
        %v522 = vmin.f32 %v394, 6.0
        %v523 = vmin.f32 %v395, 6.0
        %v524 = vmin.f32 %v396, 6.0
        %v525 = vmin.f32 %v397, 6.0
        %v526 = vmin.f32 %v398, 6.0
        %v527 = vmin.f32 %v399, 6.0
        %v528 = vmin.f32 %v400, 6.0
        %v529 = vmin.f32 %v401, 6.0
        %v530 = vmin.f32 %v402, 6.0
        %v531 = vmin.f32 %v403, 6.0
        %v532 = vmin.f32 %v404, 6.0
        %v533 = vmin.f32 %v405, 6.0
        %v534 = vmin.f32 %v406, 6.0
        %v535 = vmin.f32 %v407, 6.0
        %v536 = vmin.f32 %v408, 6.0
        %v537 = vmin.f32 %v409, 6.0
        %v538 = vmin.f32 %v410, 6.0
        %v539 = vmin.f32 %v411, 6.0
        %v540 = vmin.f32 %v412, 6.0
        %v541 = vmin.f32 %v413, 6.0
        %v542 = vmin.f32 %v414, 6.0
        %v543 = vmin.f32 %v415, 6.0
        %v544 = vmin.f32 %v416, 6.0
        %v545 = vmin.f32 %v417, 6.0
        %v546 = vmin.f32 %v418, 6.0
        %v547 = vmin.f32 %v419, 6.0
        %v548 = vmin.f32 %v420, 6.0
        %v549 = vmin.f32 %v421, 6.0
        %v550 = vmin.f32 %v422, 6.0
        %v551 = vmin.f32 %v423, 6.0
        %v552 = vmin.f32 %v424, 6.0
        %v553 = vmin.f32 %v425, 6.0
        %v554 = vmin.f32 %v426, 6.0
        %v555 = vmin.f32 %v427, 6.0
        %v556 = vmin.f32 %v428, 6.0
        %v557 = vmin.f32 %v429, 6.0
        %v558 = vmin.f32 %v430, 6.0
        %v559 = vmin.f32 %v431, 6.0
        %v560 = vmin.f32 %v432, 6.0
        %v561 = vmin.f32 %v433, 6.0
        %v562 = vmin.f32 %v434, 6.0
        %v563 = vmin.f32 %v435, 6.0
        %v564 = vmin.f32 %v436, 6.0
        %v565 = vmin.f32 %v437, 6.0
        %v566 = vmin.f32 %v438, 6.0
        %v567 = vmin.f32 %v439, 6.0
        %v568 = vmin.f32 %v440, 6.0
        %v569 = vmin.f32 %v441, 6.0
        %v570 = vmin.f32 %v442, 6.0
        %v571 = vmin.f32 %v443, 6.0
        %v572 = vmin.f32 %v444, 6.0
        %v573 = vmin.f32 %v445, 6.0
        %v574 = vmin.f32 %v446, 6.0
        %v575 = vmin.f32 %v447, 6.0
        %v576 = vmin.f32 %v448, 6.0
        %v577 = vmin.f32 %v449, 6.0
        %v578 = vmin.f32 %v450, 6.0
        %v579 = vmin.f32 %v451, 6.0
        %v580 = vmin.f32 %v452, 6.0
        %v581 = vmin.f32 %v453, 6.0
        %v582 = vmin.f32 %v454, 6.0
        %v583 = vmin.f32 %v455, 6.0
        %v584 = vmin.f32 %v456, 6.0
        %v585 = vmin.f32 %v457, 6.0
        %v586 = vmin.f32 %v458, 6.0
        %v587 = vmin.f32 %v459, 6.0
        %v588 = vmin.f32 %v460, 6.0
        %v589 = vmin.f32 %v461, 6.0
        %v590 = vmin.f32 %v462, 6.0
        %v591 = vmin.f32 %v463, 6.0
        %v592 = vmin.f32 %v464, 6.0
        %v593 = vmin.f32 %v465, 6.0
        %v594 = vmin.f32 %v466, 6.0
        %v595 = vmin.f32 %v467, 6.0
        %v596 = vmin.f32 %v468, 6.0
        %v597 = vmin.f32 %v469, 6.0
        %v598 = vmin.f32 %v470, 6.0
        %v599 = vmin.f32 %v471, 6.0
        %v600 = vmin.f32 %v472, 6.0
        %v601 = vmin.f32 %v473, 6.0
        %v602 = vmin.f32 %v474, 6.0
        %v603 = vmin.f32 %v475, 6.0
        %v604 = vmin.f32 %v476, 6.0
        %v605 = vmin.f32 %v477, 6.0
        %v606 = vmin.f32 %v478, 6.0
        %v607 = vmin.f32 %v479, 6.0
        %v608 = vmin.f32 %v480, 6.0
        %v609 = vmin.f32 %v481, 6.0
        %v610 = vmin.f32 %v482, 6.0
        %v611 = vmin.f32 %v483, 6.0
        %v612 = vmin.f32 %v484, 6.0
        %v613 = vmin.f32 %v485, 6.0
        %v614 = vmin.f32 %v486, 6.0
        %v615 = vmin.f32 %v487, 6.0
        %v616 = vmin.f32 %v488, 6.0
        %v617 = vmin.f32 %v489, 6.0
        %v618 = vmin.f32 %v490, 6.0
        %v619 = vmin.f32 %v491, 6.0
        %v620 = vmin.f32 %v492, 6.0
        %v621 = vmin.f32 %v493, 6.0
        %v622 = vmin.f32 %v494, 6.0
        %v623 = vmin.f32 %v495, 6.0
        %v624 = vmin.f32 %v496, 6.0
        %v625 = vmin.f32 %v497, 6.0
        %v626 = vmin.f32 %v498, 6.0
        %v627 = vmin.f32 %v499, 6.0
        %v628 = vmin.f32 %v500, 6.0
        %v629 = vmin.f32 %v501, 6.0
        %v630 = vmin.f32 %v502, 6.0
        %v631 = vmin.f32 %v503, 6.0
        %v632 = vmin.f32 %v504, 6.0
        %v633 = vmin.f32 %v505, 6.0
        %v634 = vmin.f32 %v506, 6.0
        %v635 = vmin.f32 %v507, 6.0
        %v636 = vmin.f32 %v508, 6.0
        %v637 = vmin.f32 %v509, 6.0
        %v638 = vmin.f32 %v510, 6.0
        %v639 = vmin.f32 %v511, 6.0
        %v640 = vmin.f32 %v512, 6.0
        %v641 = vmin.f32 %v513, 6.0
        %v642 = vmin.f32 %v514, 6.0
        %v643 = vmin.f32 %v515, 6.0
        %v644 = vmin.f32 %v516, 6.0
        %v645 = vmin.f32 %v517, 6.0
        %v646 = vmin.f32 %v518, 6.0
        %v647 = vmin.f32 %v519, 6.0
        %v648 = vmin.f32 %v520, 6.0
        %v649 = vmin.f32 %v521, 6.0
        %v650 = vmul.f32 %v138, %v522
        %v651 = vmul.f32 %v139, %v523
        %v652 = vmul.f32 %v140, %v524
        %v653 = vmul.f32 %v141, %v525
        %v654 = vmul.f32 %v142, %v526
        %v655 = vmul.f32 %v143, %v527
        %v656 = vmul.f32 %v144, %v528
        %v657 = vmul.f32 %v145, %v529
        %v658 = vmul.f32 %v146, %v530
        %v659 = vmul.f32 %v147, %v531
        %v660 = vmul.f32 %v148, %v532
        %v661 = vmul.f32 %v149, %v533
        %v662 = vmul.f32 %v150, %v534
        %v663 = vmul.f32 %v151, %v535
        %v664 = vmul.f32 %v152, %v536
        %v665 = vmul.f32 %v153, %v537
        %v666 = vmul.f32 %v154, %v538
        %v667 = vmul.f32 %v155, %v539
        %v668 = vmul.f32 %v156, %v540
        %v669 = vmul.f32 %v157, %v541
        %v670 = vmul.f32 %v158, %v542
        %v671 = vmul.f32 %v159, %v543
        %v672 = vmul.f32 %v160, %v544
        %v673 = vmul.f32 %v161, %v545
        %v674 = vmul.f32 %v162, %v546
        %v675 = vmul.f32 %v163, %v547
        %v676 = vmul.f32 %v164, %v548
        %v677 = vmul.f32 %v165, %v549
        %v678 = vmul.f32 %v166, %v550
        %v679 = vmul.f32 %v167, %v551
        %v680 = vmul.f32 %v168, %v552
        %v681 = vmul.f32 %v169, %v553
        %v682 = vmul.f32 %v170, %v554
        %v683 = vmul.f32 %v171, %v555
        %v684 = vmul.f32 %v172, %v556
        %v685 = vmul.f32 %v173, %v557
        %v686 = vmul.f32 %v174, %v558
        %v687 = vmul.f32 %v175, %v559
        %v688 = vmul.f32 %v176, %v560
        %v689 = vmul.f32 %v177, %v561
        %v690 = vmul.f32 %v178, %v562
        %v691 = vmul.f32 %v179, %v563
        %v692 = vmul.f32 %v180, %v564
        %v693 = vmul.f32 %v181, %v565
        %v694 = vmul.f32 %v182, %v566
        %v695 = vmul.f32 %v183, %v567
        %v696 = vmul.f32 %v184, %v568
        %v697 = vmul.f32 %v185, %v569
        %v698 = vmul.f32 %v186, %v570
        %v699 = vmul.f32 %v187, %v571
        %v700 = vmul.f32 %v188, %v572
        %v701 = vmul.f32 %v189, %v573
        %v702 = vmul.f32 %v190, %v574
        %v703 = vmul.f32 %v191, %v575
        %v704 = vmul.f32 %v192, %v576
        %v705 = vmul.f32 %v193, %v577
        %v706 = vmul.f32 %v194, %v578
        %v707 = vmul.f32 %v195, %v579
        %v708 = vmul.f32 %v196, %v580
        %v709 = vmul.f32 %v197, %v581
        %v710 = vmul.f32 %v198, %v582
        %v711 = vmul.f32 %v199, %v583
        %v712 = vmul.f32 %v200, %v584
        %v713 = vmul.f32 %v201, %v585
        %v714 = vmul.f32 %v202, %v586
        %v715 = vmul.f32 %v203, %v587
        %v716 = vmul.f32 %v204, %v588
        %v717 = vmul.f32 %v205, %v589
        %v718 = vmul.f32 %v206, %v590
        %v719 = vmul.f32 %v207, %v591
        %v720 = vmul.f32 %v208, %v592
        %v721 = vmul.f32 %v209, %v593
        %v722 = vmul.f32 %v210, %v594
        %v723 = vmul.f32 %v211, %v595
        %v724 = vmul.f32 %v212, %v596
        %v725 = vmul.f32 %v213, %v597
        %v726 = vmul.f32 %v214, %v598
        %v727 = vmul.f32 %v215, %v599
        %v728 = vmul.f32 %v216, %v600
        %v729 = vmul.f32 %v217, %v601
        %v730 = vmul.f32 %v218, %v602
        %v731 = vmul.f32 %v219, %v603
        %v732 = vmul.f32 %v220, %v604
        %v733 = vmul.f32 %v221, %v605
        %v734 = vmul.f32 %v222, %v606
        %v735 = vmul.f32 %v223, %v607
        %v736 = vmul.f32 %v224, %v608
        %v737 = vmul.f32 %v225, %v609
        %v738 = vmul.f32 %v226, %v610
        %v739 = vmul.f32 %v227, %v611
        %v740 = vmul.f32 %v228, %v612
        %v741 = vmul.f32 %v229, %v613
        %v742 = vmul.f32 %v230, %v614
        %v743 = vmul.f32 %v231, %v615
        %v744 = vmul.f32 %v232, %v616
        %v745 = vmul.f32 %v233, %v617
        %v746 = vmul.f32 %v234, %v618
        %v747 = vmul.f32 %v235, %v619
        %v748 = vmul.f32 %v236, %v620
        %v749 = vmul.f32 %v237, %v621
        %v750 = vmul.f32 %v238, %v622
        %v751 = vmul.f32 %v239, %v623
        %v752 = vmul.f32 %v240, %v624
        %v753 = vmul.f32 %v241, %v625
        %v754 = vmul.f32 %v242, %v626
        %v755 = vmul.f32 %v243, %v627
        %v756 = vmul.f32 %v244, %v628
        %v757 = vmul.f32 %v245, %v629
        %v758 = vmul.f32 %v246, %v630
        %v759 = vmul.f32 %v247, %v631
        %v760 = vmul.f32 %v248, %v632
        %v761 = vmul.f32 %v249, %v633
        %v762 = vmul.f32 %v250, %v634
        %v763 = vmul.f32 %v251, %v635
        %v764 = vmul.f32 %v252, %v636
        %v765 = vmul.f32 %v253, %v637
        %v766 = vmul.f32 %v254, %v638
        %v767 = vmul.f32 %v255, %v639
        %v768 = vmul.f32 %v256, %v640
        %v769 = vmul.f32 %v257, %v641
        %v770 = vmul.f32 %v258, %v642
        %v771 = vmul.f32 %v259, %v643
        %v772 = vmul.f32 %v260, %v644
        %v773 = vmul.f32 %v261, %v645
        %v774 = vmul.f32 %v262, %v646
        %v775 = vmul.f32 %v263, %v647
        %v776 = vmul.f32 %v264, %v648
        %v777 = vmul.f32 %v265, %v649
        %v778 = vmul.f32 %v650, 0.16666667
        %v779 = vmul.f32 %v651, 0.16666667
        %v780 = vmul.f32 %v652, 0.16666667
        %v781 = vmul.f32 %v653, 0.16666667
        %v782 = vmul.f32 %v654, 0.16666667
        %v783 = vmul.f32 %v655, 0.16666667
        %v784 = vmul.f32 %v656, 0.16666667
        %v785 = vmul.f32 %v657, 0.16666667
        %v786 = vmul.f32 %v658, 0.16666667
        %v787 = vmul.f32 %v659, 0.16666667
        %v788 = vmul.f32 %v660, 0.16666667
        %v789 = vmul.f32 %v661, 0.16666667
        %v790 = vmul.f32 %v662, 0.16666667
        %v791 = vmul.f32 %v663, 0.16666667
        %v792 = vmul.f32 %v664, 0.16666667
        %v793 = vmul.f32 %v665, 0.16666667
        %v794 = vmul.f32 %v666, 0.16666667
        %v795 = vmul.f32 %v667, 0.16666667
        %v796 = vmul.f32 %v668, 0.16666667
        %v797 = vmul.f32 %v669, 0.16666667
        %v798 = vmul.f32 %v670, 0.16666667
        %v799 = vmul.f32 %v671, 0.16666667
        %v800 = vmul.f32 %v672, 0.16666667
        %v801 = vmul.f32 %v673, 0.16666667
        %v802 = vmul.f32 %v674, 0.16666667
        %v803 = vmul.f32 %v675, 0.16666667
        %v804 = vmul.f32 %v676, 0.16666667
        %v805 = vmul.f32 %v677, 0.16666667
        %v806 = vmul.f32 %v678, 0.16666667
        %v807 = vmul.f32 %v679, 0.16666667
        %v808 = vmul.f32 %v680, 0.16666667
        %v809 = vmul.f32 %v681, 0.16666667
        %v810 = vmul.f32 %v682, 0.16666667
        %v811 = vmul.f32 %v683, 0.16666667
        %v812 = vmul.f32 %v684, 0.16666667
        %v813 = vmul.f32 %v685, 0.16666667
        %v814 = vmul.f32 %v686, 0.16666667
        %v815 = vmul.f32 %v687, 0.16666667
        %v816 = vmul.f32 %v688, 0.16666667
        %v817 = vmul.f32 %v689, 0.16666667
        %v818 = vmul.f32 %v690, 0.16666667
        %v819 = vmul.f32 %v691, 0.16666667
        %v820 = vmul.f32 %v692, 0.16666667
        %v821 = vmul.f32 %v693, 0.16666667
        %v822 = vmul.f32 %v694, 0.16666667
        %v823 = vmul.f32 %v695, 0.16666667
        %v824 = vmul.f32 %v696, 0.16666667
        %v825 = vmul.f32 %v697, 0.16666667
        %v826 = vmul.f32 %v698, 0.16666667
        %v827 = vmul.f32 %v699, 0.16666667
        %v828 = vmul.f32 %v700, 0.16666667
        %v829 = vmul.f32 %v701, 0.16666667
        %v830 = vmul.f32 %v702, 0.16666667
        %v831 = vmul.f32 %v703, 0.16666667
        %v832 = vmul.f32 %v704, 0.16666667
        %v833 = vmul.f32 %v705, 0.16666667
        %v834 = vmul.f32 %v706, 0.16666667
        %v835 = vmul.f32 %v707, 0.16666667
        %v836 = vmul.f32 %v708, 0.16666667
        %v837 = vmul.f32 %v709, 0.16666667
        %v838 = vmul.f32 %v710, 0.16666667
        %v839 = vmul.f32 %v711, 0.16666667
        %v840 = vmul.f32 %v712, 0.16666667
        %v841 = vmul.f32 %v713, 0.16666667
        %v842 = vmul.f32 %v714, 0.16666667
        %v843 = vmul.f32 %v715, 0.16666667
        %v844 = vmul.f32 %v716, 0.16666667
        %v845 = vmul.f32 %v717, 0.16666667
        %v846 = vmul.f32 %v718, 0.16666667
        %v847 = vmul.f32 %v719, 0.16666667
        %v848 = vmul.f32 %v720, 0.16666667
        %v849 = vmul.f32 %v721, 0.16666667
        %v850 = vmul.f32 %v722, 0.16666667
        %v851 = vmul.f32 %v723, 0.16666667
        %v852 = vmul.f32 %v724, 0.16666667
        %v853 = vmul.f32 %v725, 0.16666667
        %v854 = vmul.f32 %v726, 0.16666667
        %v855 = vmul.f32 %v727, 0.16666667
        %v856 = vmul.f32 %v728, 0.16666667
        %v857 = vmul.f32 %v729, 0.16666667
        %v858 = vmul.f32 %v730, 0.16666667
        %v859 = vmul.f32 %v731, 0.16666667
        %v860 = vmul.f32 %v732, 0.16666667
        %v861 = vmul.f32 %v733, 0.16666667
        %v862 = vmul.f32 %v734, 0.16666667
        %v863 = vmul.f32 %v735, 0.16666667
        %v864 = vmul.f32 %v736, 0.16666667
        %v865 = vmul.f32 %v737, 0.16666667
        %v866 = vmul.f32 %v738, 0.16666667
        %v867 = vmul.f32 %v739, 0.16666667
        %v868 = vmul.f32 %v740, 0.16666667
        %v869 = vmul.f32 %v741, 0.16666667
        %v870 = vmul.f32 %v742, 0.16666667
        %v871 = vmul.f32 %v743, 0.16666667
        %v872 = vmul.f32 %v744, 0.16666667
        %v873 = vmul.f32 %v745, 0.16666667
        %v874 = vmul.f32 %v746, 0.16666667
        %v875 = vmul.f32 %v747, 0.16666667
        %v876 = vmul.f32 %v748, 0.16666667
        %v877 = vmul.f32 %v749, 0.16666667
        %v878 = vmul.f32 %v750, 0.16666667
        %v879 = vmul.f32 %v751, 0.16666667
        %v880 = vmul.f32 %v752, 0.16666667
        %v881 = vmul.f32 %v753, 0.16666667
        %v882 = vmul.f32 %v754, 0.16666667
        %v883 = vmul.f32 %v755, 0.16666667
        %v884 = vmul.f32 %v756, 0.16666667
        %v885 = vmul.f32 %v757, 0.16666667
        %v886 = vmul.f32 %v758, 0.16666667
        %v887 = vmul.f32 %v759, 0.16666667
        %v888 = vmul.f32 %v760, 0.16666667
        %v889 = vmul.f32 %v761, 0.16666667
        %v890 = vmul.f32 %v762, 0.16666667
        %v891 = vmul.f32 %v763, 0.16666667
        %v892 = vmul.f32 %v764, 0.16666667
        %v893 = vmul.f32 %v765, 0.16666667
        %v894 = vmul.f32 %v766, 0.16666667
        %v895 = vmul.f32 %v767, 0.16666667
        %v896 = vmul.f32 %v768, 0.16666667
        %v897 = vmul.f32 %v769, 0.16666667
        %v898 = vmul.f32 %v770, 0.16666667
        %v899 = vmul.f32 %v771, 0.16666667
        %v900 = vmul.f32 %v772, 0.16666667
        %v901 = vmul.f32 %v773, 0.16666667
        %v902 = vmul.f32 %v774, 0.16666667
        %v903 = vmul.f32 %v775, 0.16666667
        %v904 = vmul.f32 %v776, 0.16666667
        %v905 = vmul.f32 %v777, 0.16666667
        %906 = vst [vmem:[%s135] sm:$0xff] %v778
        %907 = vst [vmem:[%s135 + $0x8] sm:$0xff] %v779
        %908 = vst [vmem:[%s135 + $0x10] sm:$0xff] %v780
        %909 = vst [vmem:[%s135 + $0x18] sm:$0xff] %v781
        %910 = vst [vmem:[%s135 + $0x20] sm:$0xff] %v782
        %911 = vst [vmem:[%s135 + $0x28] sm:$0xff] %v783
        %912 = vst [vmem:[%s135 + $0x30] sm:$0xff] %v784
        %913 = vst [vmem:[%s135 + $0x38] sm:$0xff] %v785
        %914 = vst [vmem:[%s135 + $0x40] sm:$0xff] %v786
        %915 = vst [vmem:[%s135 + $0x48] sm:$0xff] %v787
        %916 = vst [vmem:[%s135 + $0x50] sm:$0xff] %v788
        %917 = vst [vmem:[%s135 + $0x58] sm:$0xff] %v789
        %918 = vst [vmem:[%s135 + $0x60] sm:$0xff] %v790
        %919 = vst [vmem:[%s135 + $0x68] sm:$0xff] %v791
        %920 = vst [vmem:[%s135 + $0x70] sm:$0xff] %v792
        %921 = vst [vmem:[%s135 + $0x78] sm:$0xff] %v793
        %922 = vst [vmem:[%s135 + $0x80] sm:$0xff] %v794
        %923 = vst [vmem:[%s135 + $0x88] sm:$0xff] %v795
        %924 = vst [vmem:[%s135 + $0x90] sm:$0xff] %v796
        %925 = vst [vmem:[%s135 + $0x98] sm:$0xff] %v797
        %926 = vst [vmem:[%s135 + $0xa0] sm:$0xff] %v798
        %927 = vst [vmem:[%s135 + $0xa8] sm:$0xff] %v799
        %928 = vst [vmem:[%s135 + $0xb0] sm:$0xff] %v800
        %929 = vst [vmem:[%s135 + $0xb8] sm:$0xff] %v801
        %930 = vst [vmem:[%s135 + $0xc0] sm:$0xff] %v802
        %931 = vst [vmem:[%s135 + $0xc8] sm:$0xff] %v803
        %932 = vst [vmem:[%s135 + $0xd0] sm:$0xff] %v804
        %933 = vst [vmem:[%s135 + $0xd8] sm:$0xff] %v805
        %934 = vst [vmem:[%s135 + $0xe0] sm:$0xff] %v806
        %935 = vst [vmem:[%s135 + $0xe8] sm:$0xff] %v807
        %936 = vst [vmem:[%s135 + $0xf0] sm:$0xff] %v808
        %937 = vst [vmem:[%s135 + $0xf8] sm:$0xff] %v809
        %938 = vst [vmem:[%s135 + $0x100] sm:$0xff] %v810
        %939 = vst [vmem:[%s135 + $0x108] sm:$0xff] %v811
        %940 = vst [vmem:[%s135 + $0x110] sm:$0xff] %v812
        %941 = vst [vmem:[%s135 + $0x118] sm:$0xff] %v813
        %942 = vst [vmem:[%s135 + $0x120] sm:$0xff] %v814
        %943 = vst [vmem:[%s135 + $0x128] sm:$0xff] %v815
        %944 = vst [vmem:[%s135 + $0x130] sm:$0xff] %v816
        %945 = vst [vmem:[%s135 + $0x138] sm:$0xff] %v817
        %946 = vst [vmem:[%s135 + $0x140] sm:$0xff] %v818
        %947 = vst [vmem:[%s135 + $0x148] sm:$0xff] %v819
        %948 = vst [vmem:[%s135 + $0x150] sm:$0xff] %v820
        %949 = vst [vmem:[%s135 + $0x158] sm:$0xff] %v821
        %950 = vst [vmem:[%s135 + $0x160] sm:$0xff] %v822
        %951 = vst [vmem:[%s135 + $0x168] sm:$0xff] %v823
        %952 = vst [vmem:[%s135 + $0x170] sm:$0xff] %v824
        %953 = vst [vmem:[%s135 + $0x178] sm:$0xff] %v825
        %954 = vst [vmem:[%s135 + $0x180] sm:$0xff] %v826
        %955 = vst [vmem:[%s135 + $0x188] sm:$0xff] %v827
        %956 = vst [vmem:[%s135 + $0x190] sm:$0xff] %v828
        %957 = vst [vmem:[%s135 + $0x198] sm:$0xff] %v829
        %958 = vst [vmem:[%s135 + $0x1a0] sm:$0xff] %v830
        %959 = vst [vmem:[%s135 + $0x1a8] sm:$0xff] %v831
        %960 = vst [vmem:[%s135 + $0x1b0] sm:$0xff] %v832
        %961 = vst [vmem:[%s135 + $0x1b8] sm:$0xff] %v833
        %962 = vst [vmem:[%s135 + $0x1c0] sm:$0xff] %v834
        %963 = vst [vmem:[%s135 + $0x1c8] sm:$0xff] %v835
        %964 = vst [vmem:[%s135 + $0x1d0] sm:$0xff] %v836
        %965 = vst [vmem:[%s135 + $0x1d8] sm:$0xff] %v837
        %966 = vst [vmem:[%s135 + $0x1e0] sm:$0xff] %v838
        %967 = vst [vmem:[%s135 + $0x1e8] sm:$0xff] %v839
        %968 = vst [vmem:[%s135 + $0x1f0] sm:$0xff] %v840
        %969 = vst [vmem:[%s135 + $0x1f8] sm:$0xff] %v841
        %970 = vst [vmem:[%s135 + $0x200] sm:$0xff] %v842
        %971 = vst [vmem:[%s135 + $0x208] sm:$0xff] %v843
        %972 = vst [vmem:[%s135 + $0x210] sm:$0xff] %v844
        %973 = vst [vmem:[%s135 + $0x218] sm:$0xff] %v845
        %974 = vst [vmem:[%s135 + $0x220] sm:$0xff] %v846
        %975 = vst [vmem:[%s135 + $0x228] sm:$0xff] %v847
        %976 = vst [vmem:[%s135 + $0x230] sm:$0xff] %v848
        %977 = vst [vmem:[%s135 + $0x238] sm:$0xff] %v849
        %978 = vst [vmem:[%s135 + $0x240] sm:$0xff] %v850
        %979 = vst [vmem:[%s135 + $0x248] sm:$0xff] %v851
        %980 = vst [vmem:[%s135 + $0x250] sm:$0xff] %v852
        %981 = vst [vmem:[%s135 + $0x258] sm:$0xff] %v853
        %982 = vst [vmem:[%s135 + $0x260] sm:$0xff] %v854
        %983 = vst [vmem:[%s135 + $0x268] sm:$0xff] %v855
        %984 = vst [vmem:[%s135 + $0x270] sm:$0xff] %v856
        %985 = vst [vmem:[%s135 + $0x278] sm:$0xff] %v857
        %986 = vst [vmem:[%s135 + $0x280] sm:$0xff] %v858
        %987 = vst [vmem:[%s135 + $0x288] sm:$0xff] %v859
        %988 = vst [vmem:[%s135 + $0x290] sm:$0xff] %v860
        %989 = vst [vmem:[%s135 + $0x298] sm:$0xff] %v861
        %990 = vst [vmem:[%s135 + $0x2a0] sm:$0xff] %v862
        %991 = vst [vmem:[%s135 + $0x2a8] sm:$0xff] %v863
        %992 = vst [vmem:[%s135 + $0x2b0] sm:$0xff] %v864
        %993 = vst [vmem:[%s135 + $0x2b8] sm:$0xff] %v865
        %994 = vst [vmem:[%s135 + $0x2c0] sm:$0xff] %v866
        %995 = vst [vmem:[%s135 + $0x2c8] sm:$0xff] %v867
        %996 = vst [vmem:[%s135 + $0x2d0] sm:$0xff] %v868
        %997 = vst [vmem:[%s135 + $0x2d8] sm:$0xff] %v869
        %998 = vst [vmem:[%s135 + $0x2e0] sm:$0xff] %v870
        %999 = vst [vmem:[%s135 + $0x2e8] sm:$0xff] %v871
        %1000 = vst [vmem:[%s135 + $0x2f0] sm:$0xff] %v872
        %1001 = vst [vmem:[%s135 + $0x2f8] sm:$0xff] %v873
        %1002 = vst [vmem:[%s135 + $0x300] sm:$0xff] %v874
        %1003 = vst [vmem:[%s135 + $0x308] sm:$0xff] %v875
        %1004 = vst [vmem:[%s135 + $0x310] sm:$0xff] %v876
        %1005 = vst [vmem:[%s135 + $0x318] sm:$0xff] %v877
        %1006 = vst [vmem:[%s135 + $0x320] sm:$0xff] %v878
        %1007 = vst [vmem:[%s135 + $0x328] sm:$0xff] %v879
        %1008 = vst [vmem:[%s135 + $0x330] sm:$0xff] %v880
        %1009 = vst [vmem:[%s135 + $0x338] sm:$0xff] %v881
        %1010 = vst [vmem:[%s135 + $0x340] sm:$0xff] %v882
        %1011 = vst [vmem:[%s135 + $0x348] sm:$0xff] %v883
        %1012 = vst [vmem:[%s135 + $0x350] sm:$0xff] %v884
        %1013 = vst [vmem:[%s135 + $0x358] sm:$0xff] %v885
        %1014 = vst [vmem:[%s135 + $0x360] sm:$0xff] %v886
        %1015 = vst [vmem:[%s135 + $0x368] sm:$0xff] %v887
        %1016 = vst [vmem:[%s135 + $0x370] sm:$0xff] %v888
        %1017 = vst [vmem:[%s135 + $0x378] sm:$0xff] %v889
        %1018 = vst [vmem:[%s135 + $0x380] sm:$0xff] %v890
        %1019 = vst [vmem:[%s135 + $0x388] sm:$0xff] %v891
        %1020 = vst [vmem:[%s135 + $0x390] sm:$0xff] %v892
        %1021 = vst [vmem:[%s135 + $0x398] sm:$0xff] %v893
        %1022 = vst [vmem:[%s135 + $0x3a0] sm:$0xff] %v894
        %1023 = vst [vmem:[%s135 + $0x3a8] sm:$0xff] %v895
        %1024 = vst [vmem:[%s135 + $0x3b0] sm:$0xff] %v896
        %1025 = vst [vmem:[%s135 + $0x3b8] sm:$0xff] %v897
        %1026 = vst [vmem:[%s135 + $0x3c0] sm:$0xff] %v898
        %1027 = vst [vmem:[%s135 + $0x3c8] sm:$0xff] %v899
        %1028 = vst [vmem:[%s135 + $0x3d0] sm:$0xff] %v900
        %1029 = vst [vmem:[%s135 + $0x3d8] sm:$0xff] %v901
        %1030 = vst [vmem:[%s135 + $0x3e0] sm:$0xff] %v902
        %1031 = vst [vmem:[%s135 + $0x3e8] sm:$0xff] %v903
        %1032 = vst [vmem:[%s135 + $0x3f0] sm:$0xff] %v904
        %1033 = vst [vmem:[%s135 + $0x3f8] sm:$0xff] %v905
        %s1034 = sand.u32 %s52, 1
        %s1035 = scalar_lea.sflag [#allocation4], %s1034
        %s1036 = sand.u32 %s52, 1
        %s1037 = smul.addr %s1036, 1024
        %s1038 = scalar_lea.vmem [#allocation5], %s1037
        // Predicated region
        $region29: #{tpu_custom_call.1} parent=23 // pred_check
          %p1039 = pneg %p62
        $region30: #{tpu_custom_call.1} parent=23 // pred_check_branch
          %1041 = sbr.rel (%p1039) target = $region32
        $region31: #{tpu_custom_call.1} parent=23 // pred_region
          %s1042 = smul.u32 8, %s18
          %s1044 = ssub.s32 16384, 16384
          %1045 = vsyncadd %s1035, %s1044
          %s1046 = smul.addr %s1042, 16
          %s1047 = smul.addr %s1046, 128
          %s1048 = scalar_lea.hbm %s1, %s1047
          %s1049 = sshll.u32 %s1038, 4
          %s1050 = int_to_ptr.vmem [resolvable:$true] %s1049
          %1055 = dma.vmem_to_hbm [thread:$0]  %s1050, 16384, %s1048, %s1035, 2048, 2048, 128
        $region32: #{tpu_custom_call.1} parent=23 // pred_fallthru
          _
      $region24: #{tpu_custom_call.1} parent=5 // pred_fallthru
        _
      %p1056 = scmp.le.s32.totalorder 2, %s13
      // Predicated region
      $region33: #{tpu_custom_call.1} parent=5 // pred_check
        %p1057 = pneg %p1056
      $region34: #{tpu_custom_call.1} parent=5 // pred_check_branch
        %1059 = sbr.rel (%p1057) target = $region36
      $region35: #{tpu_custom_call.1} parent=5 // pred_region
        %s1060 = ssub.s32 %s13, 2
        // Predicated region
        $region37: #{tpu_custom_call.1} parent=35 // pred_check
          %p1061 = pneg %p68
        $region38: #{tpu_custom_call.1} parent=35 // pred_check_branch
          %1063 = sbr.rel (%p1061) target = $region40
        $region39: #{tpu_custom_call.1} parent=35 // pred_region
          %s1064 = sand.u32 %s53, 1
          %s1065 = scalar_lea.sflag [#allocation4], %s1064
          %s1066 = sand.u32 %s53, 1
          %s1067 = smul.addr %s1066, 1024
          %s1068 = scalar_lea.vmem [#allocation5], %s1067
          %1069 = dma.done %s1065, 16384
        $region40: #{tpu_custom_call.1} parent=35 // pred_fallthru
          _
      $region36: #{tpu_custom_call.1} parent=5 // pred_fallthru
        _
    $region6: #{tpu_custom_call.1} parent=1 // loop_footer
      %s17 = sadd.s32 1, %s13
    $region7: #{tpu_custom_call.1} parent=1 // loop_footer_branch
      %12 = sbr.rel target = $region3
    $region8: #{tpu_custom_call.1} parent=1 // loop_exit
      _
    %1070 = vsyncpa [#allocation3], 1
    %s1071 = scalar_lea.sflag [#allocation3], 1
    %1072 = vsyncpa %s1071, 1
    %1073 = vsyncpa [#allocation4], 1
    %s1074 = scalar_lea.sflag [#allocation4], 1
    %1075 = vsyncpa %s1074, 1

</llo_original>
